<compile_context>
chip_gen: v6e
topology: v6e:2x2x1
jax: 0.10.0
libtpu: 0.0.40
codegen_flags: <defaults>
</compile_context>

<pallas_src>
import functools
import math

import jax
import jax.numpy as jnp
from jax import lax
from jax.experimental import pallas as pl
from jax.experimental.pallas import tpu as pltpu


def _vmem_limit_bytes():
    """Generation-aware scoped-VMEM limit: ~3/4 of physical, capped at 100 MiB."""
    try:
        cap = pltpu.get_tpu_info().vmem_capacity_bytes
    except Exception:
        cap = 64 * 1024 * 1024  # conservative (v7x-sized) fallback
    return int(min(cap * 3 // 4, 100 * 1024 * 1024))


# ----------------------------- projections (GEMM) -----------------------------
def _linear_kernel(x_ref, w_ref, b_ref, o_ref):
    x = x_ref[...].astype(w_ref.dtype)            # bf16 operands for the MXU
    acc = jnp.dot(x, w_ref[...], preferred_element_type=jnp.float32)
    o_ref[...] = (acc + b_ref[...]).astype(o_ref.dtype)


def linear(x, w, b, *, out_dtype, vmem_limit, block_rows=512, block_cols=1024):
    """Row- and column-tiled dense layer. x:(N,Hin) w:(Hin,Hout) b:(1,Hout)."""
    N, Hin = x.shape
    Hout = w.shape[1]
    tm = N if N <= block_rows else block_rows
    tn = Hout if Hout <= block_cols else block_cols
    assert N % tm == 0 and Hout % tn == 0
    return pl.pallas_call(
        _linear_kernel,
        out_shape=jax.ShapeDtypeStruct((N, Hout), out_dtype),
        grid=(N // tm, Hout // tn),
        in_specs=[
            pl.BlockSpec((tm, Hin), lambda i, j: (i, 0)),
            pl.BlockSpec((Hin, tn), lambda i, j: (0, j)),
            pl.BlockSpec((1, tn), lambda i, j: (0, j)),
        ],
        out_specs=pl.BlockSpec((tm, tn), lambda i, j: (i, j)),
        compiler_params=pltpu.CompilerParams(
            dimension_semantics=("parallel", "parallel"),
            vmem_limit_bytes=vmem_limit),
    )(x, w, b)


def _kv_linear_kernel(x_ref, wk_ref, bk_ref, wv_ref, bv_ref, k_ref, v_ref):
    # One load of the context activations feeds both the K and V GEMMs.
    x = x_ref[...].astype(wk_ref.dtype)
    k_ref[...] = (jnp.dot(x, wk_ref[...], preferred_element_type=jnp.float32)
                  + bk_ref[...]).astype(k_ref.dtype)
    v_ref[...] = (jnp.dot(x, wv_ref[...], preferred_element_type=jnp.float32)
                  + bv_ref[...]).astype(v_ref.dtype)


def kv_linear(x, wk, bk, wv, bv, *, out_dtype, vmem_limit,
              block_rows=512, block_cols=1024):
    """Fused K/V projections sharing one (row, column)-tiled pass over x."""
    N, Hin = x.shape
    Hout = wk.shape[1]
    tm = N if N <= block_rows else block_rows
    tn = Hout if Hout <= block_cols else block_cols
    assert N % tm == 0 and Hout % tn == 0
    return pl.pallas_call(
        _kv_linear_kernel,
        out_shape=(jax.ShapeDtypeStruct((N, Hout), out_dtype),
                   jax.ShapeDtypeStruct((N, Hout), out_dtype)),
        grid=(N // tm, Hout // tn),
        in_specs=[
            pl.BlockSpec((tm, Hin), lambda i, j: (i, 0)),
            pl.BlockSpec((Hin, tn), lambda i, j: (0, j)),
            pl.BlockSpec((1, tn), lambda i, j: (0, j)),
            pl.BlockSpec((Hin, tn), lambda i, j: (0, j)),
            pl.BlockSpec((1, tn), lambda i, j: (0, j)),
        ],
        out_specs=(pl.BlockSpec((tm, tn), lambda i, j: (i, j)),
                   pl.BlockSpec((tm, tn), lambda i, j: (i, j))),
        compiler_params=pltpu.CompilerParams(
            dimension_semantics=("parallel", "parallel"),
            vmem_limit_bytes=vmem_limit),
    )(x, wk, bk, wv, bv)


# ------------------------------ attention core --------------------------------
def _coattn_single_kernel(q_ref, k_ref, v_ref, bias_ref, o_ref, *,
                          num_heads, head_dim):
    """Fast path (whole key axis in one tile): plain softmax, no scratch."""
    bias = bias_ref[...]                                      # (1, Sk) f32
    for h in range(num_heads):
        lo, hi = h * head_dim, (h + 1) * head_dim
        qh = q_ref[:, lo:hi]                                  # (tq, D) bf16 (pre-scaled)
        kh = k_ref[:, lo:hi]                                  # (Sk, D) bf16
        vh = v_ref[:, lo:hi]                                  # (Sk, D) bf16
        s = lax.dot_general(qh, kh, (((1,), (1,)), ((), ())),
                            preferred_element_type=jnp.float32) + bias
        m = jnp.max(s, axis=-1, keepdims=True)
        p = jnp.exp(s - m)                                    # f32 exp
        l = jnp.sum(p, axis=-1, keepdims=True)
        o = jnp.dot(p.astype(vh.dtype), vh,
                    preferred_element_type=jnp.float32)
        o_ref[:, lo:hi] = (o * pl.reciprocal(l, approx=True)).astype(o_ref.dtype)


def _coattn_flash_kernel(q_ref, k_ref, v_ref, bias_ref, o_ref,
                         m_sc, l_sc, acc_sc, *, num_heads, head_dim):
    """Tiled key axis: flash-style online softmax, heads fused per kt step."""
    kt = pl.program_id(2)

    @pl.when(kt == 0)
    def _():
        m_sc[...] = jnp.full_like(m_sc, -jnp.inf)
        l_sc[...] = jnp.zeros_like(l_sc)
        acc_sc[...] = jnp.zeros_like(acc_sc)

    bias = bias_ref[...]                                      # (1, tk) f32
    for h in range(num_heads):
        lo, hi = h * head_dim, (h + 1) * head_dim
        qh = q_ref[:, lo:hi]                                  # (tq, D) bf16 (pre-scaled)
        kh = k_ref[:, lo:hi]                                  # (tk, D) bf16
        vh = v_ref[:, lo:hi]                                  # (tk, D) bf16

        # QK^T contracting the head dim on the MXU (no explicit k.T).
        s = lax.dot_general(qh, kh, (((1,), (1,)), ((), ())),
                            preferred_element_type=jnp.float32) + bias

        m_prev = m_sc[h]                                      # (tq, 128), lane-replicated
        m_new = jnp.maximum(m_prev, jnp.max(s, axis=-1, keepdims=True))
        alpha = jnp.exp(m_prev - m_new)                       # (tq, 128)
        p = jnp.exp(s - m_new[:, 0:1])                        # (tq, tk) f32
        l_sc[h] = alpha * l_sc[h] + jnp.sum(p, axis=-1, keepdims=True)
        acc_sc[:, lo:hi] = (alpha[:, 0:1] * acc_sc[:, lo:hi]
                            + jnp.dot(p.astype(vh.dtype), vh,
                                      preferred_element_type=jnp.float32))
        m_sc[h] = m_new

    @pl.when(kt == pl.num_programs(2) - 1)
    def _():
        for h in range(num_heads):
            lo, hi = h * head_dim, (h + 1) * head_dim
            l_h = l_sc[h]
            inv = pl.reciprocal(l_h[:, 0:1], approx=True)
            o_ref[:, lo:hi] = (acc_sc[:, lo:hi] * inv).astype(o_ref.dtype)


def co_attention(context_states, query_states, attention_mask, params,
                 num_heads, *, block_q=256, block_k=512,
                 compute_dtype=jnp.bfloat16):
    """Pallas implementation of CoAttention.forward.

    context_states: (B, Sk, H)   -> keys / values
    query_states:   (B, Sq, H)   -> queries
    attention_mask: (B, Sk)      -> 1 = attend, 0 = pad
    returns:        (B, Sq, H)   (dtype of query_states)
    """
    B, Sq, H = query_states.shape
    _, Sk, _ = context_states.shape
    assert H % num_heads == 0
    D = H // num_heads
    scale = 1.0 / math.sqrt(D)
    out_dtype = query_states.dtype
    vmem_limit = _vmem_limit_bytes()

    # Fold 1/sqrt(D) into the query projection (exact); weights in compute dtype
    # so projections and attention matmuls all feed bf16 operands to the MXU.
    wq = (params["wq"].astype(jnp.float32) * scale).astype(compute_dtype)
    bq = params["bq"].astype(jnp.float32) * scale
    wk = params["wk"].astype(compute_dtype)
    wv = params["wv"].astype(compute_dtype)
    bk = params["bk"].astype(jnp.float32)
    bv = params["bv"].astype(jnp.float32)

    q = linear(query_states.reshape(B * Sq, H), wq, bq,
               out_dtype=compute_dtype, vmem_limit=vmem_limit)
    k, v = kv_linear(context_states.reshape(B * Sk, H), wk, bk, wv, bv,
                     out_dtype=compute_dtype, vmem_limit=vmem_limit)
    q = q.reshape(B, Sq, H)      # stays (B, S, H): heads sliced in-VMEM
    k = k.reshape(B, Sk, H)
    v = v.reshape(B, Sk, H)

    # Additive mask bias computed once in the wrapper: (B, 1, Sk).
    bias = ((1.0 - attention_mask.astype(jnp.float32)) * (-10000.0)
            ).reshape(B, 1, Sk)

    tq = Sq if Sq <= block_q else block_q
    tk = Sk if Sk <= block_k else block_k
    assert Sq % tq == 0, "query length must be a multiple of the query tile"
    assert Sk % tk == 0, "key length must be a multiple of the key tile"
    n_qt = Sq // tq
    n_kt = Sk // tk

    itemsize = jnp.dtype(compute_dtype).itemsize
    cost = pl.CostEstimate(
        flops=4 * B * Sq * Sk * H,                            # two matmuls
        transcendentals=B * num_heads * Sq * Sk,              # exp
        bytes_accessed=(itemsize * (B * Sq * H + 2 * B * Sk * H)
                        + jnp.dtype(out_dtype).itemsize * B * Sq * H
                        + 4 * B * Sk),
    )

    if n_kt == 1:
        # Fast path: no online-softmax scaffolding needed.
        kernel = functools.partial(_coattn_single_kernel,
                                   num_heads=num_heads, head_dim=D)
        return pl.pallas_call(
            kernel,
            out_shape=jax.ShapeDtypeStruct((B, Sq, H), out_dtype),
            grid=(B, n_qt),
            in_specs=[
                pl.BlockSpec((None, tq, H), lambda b, qi: (b, qi, 0)),
                pl.BlockSpec((None, Sk, H), lambda b, qi: (b, 0, 0)),
                pl.BlockSpec((None, Sk, H), lambda b, qi: (b, 0, 0)),
                pl.BlockSpec((None, 1, Sk), lambda b, qi: (b, 0, 0)),
            ],
            out_specs=pl.BlockSpec((None, tq, H), lambda b, qi: (b, qi, 0)),
            compiler_params=pltpu.CompilerParams(
                dimension_semantics=("parallel", "parallel"),
                vmem_limit_bytes=vmem_limit),
            cost_estimate=cost,
        )(q, k, v, bias)

    assert tk % 128 == 0, "key tile must be lane-aligned when Sk is tiled"
    kernel = functools.partial(_coattn_flash_kernel,
                               num_heads=num_heads, head_dim=D)
    return pl.pallas_call(
        kernel,
        out_shape=jax.ShapeDtypeStruct((B, Sq, H), out_dtype),
        grid=(B, n_qt, n_kt),
        in_specs=[
            pl.BlockSpec((None, tq, H), lambda b, qi, kt: (b, qi, 0)),
            pl.BlockSpec((None, tk, H), lambda b, qi, kt: (b, kt, 0)),
            pl.BlockSpec((None, tk, H), lambda b, qi, kt: (b, kt, 0)),
            pl.BlockSpec((None, 1, tk), lambda b, qi, kt: (b, 0, kt)),
        ],
        out_specs=pl.BlockSpec((None, tq, H), lambda b, qi, kt: (b, qi, 0)),
        scratch_shapes=[
            pltpu.VMEM((num_heads, tq, 128), jnp.float32),   # running max m
            pltpu.VMEM((num_heads, tq, 128), jnp.float32),   # running sum l
            pltpu.VMEM((tq, H), jnp.float32),                # output accumulator
        ],
        compiler_params=pltpu.CompilerParams(
            dimension_semantics=("parallel", "parallel", "arbitrary"),
            vmem_limit_bytes=vmem_limit),
        cost_estimate=cost,
    )(q, k, v, bias)


# ----------------------------------- main --------------------------------------
if __name__ == "__main__":
    # Small config: hidden=256, 2 heads (head_dim=128), key length 256.
    B, Sq, Sk, H, NH = 2, 8, 256, 256, 2

    key = jax.random.PRNGKey(0)
    keys = jax.random.split(key, 8)

    w_scale = 1.0 / math.sqrt(H)
    params = {
        "wq": jax.random.normal(keys[0], (H, H), jnp.float32) * w_scale,
        "bq": jax.random.normal(keys[1], (1, H), jnp.float32) * 0.01,
        "wk": jax.random.normal(keys[2], (H, H), jnp.float32) * w_scale,
        "bk": jax.random.normal(keys[3], (1, H), jnp.float32) * 0.01,
        "wv": jax.random.normal(keys[4], (H, H), jnp.float32) * w_scale,
        "bv": jax.random.normal(keys[5], (1, H), jnp.float32) * 0.01,
    }

    context_states = jax.random.normal(keys[6], (B, Sk, H), jnp.float32)
    query_states = jax.random.normal(keys[7], (B, Sq, H), jnp.float32)

    # Attention mask over the context sequence (1 = keep, 0 = pad).
    attention_mask = jnp.ones((B, Sk), jnp.float32)
    attention_mask = attention_mask.at[1, Sk - 7:].set(0.0)

    # Exercise both kernel paths: fast (single key tile) and flash (tiled keys).
    out_fast = jax.block_until_ready(
        co_attention(context_states, query_states, attention_mask, params, NH))
    out_flash = jax.block_until_ready(
        co_attention(context_states, query_states, attention_mask, params, NH,
                     block_k=128))
    assert out_fast.shape == (B, Sq, H) and out_flash.shape == (B, Sq, H)

    # Pure-JAX f32 reference (same math as the PyTorch module).
    def reference(ctx, qry, mask, p, nh):
        b, sq, h = qry.shape
        _, sk, _ = ctx.shape
        d = h // nh
        qh = (qry.reshape(b * sq, h) @ p["wq"] + p["bq"]
              ).reshape(b, sq, nh, d).transpose(0, 2, 1, 3)
        kh = (ctx.reshape(b * sk, h) @ p["wk"] + p["bk"]
              ).reshape(b, sk, nh, d).transpose(0, 2, 1, 3)
        vh = (ctx.reshape(b * sk, h) @ p["wv"] + p["bv"]
              ).reshape(b, sk, nh, d).transpose(0, 2, 1, 3)
        s = jnp.einsum("bhqd,bhkd->bhqk", qh, kh) / math.sqrt(d)
        s = s + ((1.0 - mask) * -10000.0)[:, None, None, :]
        pr = jax.nn.softmax(s, axis=-1)
        o = jnp.einsum("bhqk,bhkd->bhqd", pr, vh)
        return o.transpose(0, 2, 1, 3).reshape(b, sq, h)

    ref = reference(context_states, query_states, attention_mask, params, NH)
    # bf16 MXU operands + approx reciprocal -> compare at 2e-2 (acc/softmax f32).
    for name, out in (("fast", out_fast), ("flash", out_flash)):
        max_err = float(jnp.max(jnp.abs(out.astype(jnp.float32) - ref)))
        assert jnp.allclose(out.astype(jnp.float32), ref,
                            rtol=2e-2, atol=2e-2), (name, max_err)

    print("KERNEL_OK")
</pallas_src>

<mosaic_0001>
module attributes {stable_mosaic.version = 11 : i64} {
  func.func @_linear_kernel(%arg0: i32, %arg1: i32, %arg2: memref<16x256xf32, #tpu.memory_space<vmem>>, %arg3: memref<256x256xbf16, #tpu.memory_space<vmem>>, %arg4: memref<1x256xf32, #tpu.memory_space<vmem>>, %arg5: memref<16x256xbf16, #tpu.memory_space<vmem>>) attributes {dimension_semantics = [#tpu.dimension_semantics<parallel>, #tpu.dimension_semantics<parallel>], iteration_bounds = array<i64: 1, 1>, scalar_prefetch = 0 : i64, scratch_operands = 0 : i64, tpu.core_type = #tpu.core_type<tc>, window_params = [{transform_indices = @transform_0, window_bounds = array<i64: 16, 256>}, {transform_indices = @transform_1, window_bounds = array<i64: 256, 256>}, {transform_indices = @transform_2, window_bounds = array<i64: 1, 256>}, {transform_indices = @transform_3, window_bounds = array<i64: 16, 256>}]} {
    %c0 = arith.constant 0 : index
    %c0_0 = arith.constant 0 : index
    %0 = vector.load %arg2[%c0, %c0_0] : memref<16x256xf32, #tpu.memory_space<vmem>>, vector<16x256xf32>
    %1 = arith.truncf %0 : vector<16x256xf32> to vector<16x256xbf16>
    %c0_1 = arith.constant 0 : index
    %c0_2 = arith.constant 0 : index
    %2 = vector.load %arg3[%c0_1, %c0_2] : memref<256x256xbf16, #tpu.memory_space<vmem>>, vector<256x256xbf16>
    %cst = arith.constant dense<0.000000e+00> : vector<16x256xf32>
    %3 = tpu.matmul %1, %2, %cst {dimension_numbers = #tpu.dot_dimension_numbers<[1], [0], [0], [1], [0, 0, 1, 1], [], []>} : vector<16x256xbf16>, vector<256x256xbf16>, vector<16x256xf32> -> vector<16x256xf32>
    %c0_3 = arith.constant 0 : index
    %c0_4 = arith.constant 0 : index
    %4 = vector.load %arg4[%c0_3, %c0_4] : memref<1x256xf32, #tpu.memory_space<vmem>>, vector<1x256xf32>
    %5 = vector.broadcast %4 : vector<1x256xf32> to vector<16x256xf32>
    %6 = arith.addf %3, %5 : vector<16x256xf32>
    %7 = arith.truncf %6 : vector<16x256xf32> to vector<16x256xbf16>
    %c0_5 = arith.constant 0 : index
    %c0_6 = arith.constant 0 : index
    %8 = vector.load %arg5[%c0_5, %c0_6] : memref<16x256xbf16, #tpu.memory_space<vmem>>, vector<16x256xbf16>
    tpu.vector_store %arg5[%c0_5, %c0_6], %7 {strides = array<i32>} : memref<16x256xbf16, #tpu.memory_space<vmem>>, vector<16x256xbf16>,
    return
  }
  func.func @transform_0(%arg0: i32, %arg1: i32) -> (i32, i32) {
    %c0_i32 = arith.constant 0 : i32
    %c0_i32_0 = arith.constant 0 : i32
    return %arg0, %c0_i32 : i32, i32
  }
  func.func @transform_1(%arg0: i32, %arg1: i32) -> (i32, i32) {
    %c0_i32 = arith.constant 0 : i32
    %c0_i32_0 = arith.constant 0 : i32
    return %c0_i32, %arg1 : i32, i32
  }
  func.func @transform_2(%arg0: i32, %arg1: i32) -> (i32, i32) {
    %c0_i32 = arith.constant 0 : i32
    %c0_i32_0 = arith.constant 0 : i32
    return %c0_i32, %arg1 : i32, i32
  }
  func.func @transform_3(%arg0: i32, %arg1: i32) -> (i32, i32) {
    %c0_i32 = arith.constant 0 : i32
    return %arg0, %arg1 : i32, i32
  }
}

</mosaic_0001>

<llo_original>
// kernel: tpu_custom_call.1
$region0: #{tpu_custom_call.1}
  #allocation0 [shape = 'u32[]', space=smem, size = 0x4, offset = 0x4, fixed_abs, tag = 'smem constant byte address 0x4 - core index']
  #allocation1 [shape = 'u32[144,128]{1,0:T(1,128)}', space=vmem, size = 0x12000, scoped, tag = 'internal scratch']
  %s0 = inlined_call_operand.hbm [shape: f32[16,256], index: 0, kind: input, shape index: {}]
  %s1 = inlined_call_operand.hbm [shape: bf16[256,256], index: 1, kind: input, shape index: {}]
  %s2 = inlined_call_operand.vmem [shape: f32[1,256], index: 2, kind: input, shape index: {}]
  %s3 = inlined_call_operand.hbm [shape: bf16[16,256], index: 3, kind: output, shape index: {}]
  %s4 = sld [smem:[#allocation0]]
  $region30: #{tpu_custom_call.1} parent=0
    _
  %s6 = ssub.s32 1, %s4
  %s7 = scalar_select 0, %s6, %s4
  $region1: #{tpu_custom_call.1} parent=0
    #allocation2 [shape = 'u8[16384]{0}', space=vmem, size = 0x4000, scoped, tag = 'input window, operand 0, single buffered']
    #allocation3 [shape = 's32[1]{0}', space=sflag, size = 0x4, scoped, tag = 'scoped memory for tpu_custom_call.1']
    #allocation4 [shape = 's32[1]{0}', space=sflag, size = 0x4, scoped, tag = 'scoped memory for tpu_custom_call.1']
    #allocation5 [shape = 'u8[131072]{0}', space=vmem, size = 0x20000, scoped, tag = 'input window, operand 1, single buffered']
    #allocation6 [shape = 's32[1]{0}', space=sflag, size = 0x4, scoped, tag = 'scoped memory for tpu_custom_call.1']
    #allocation7 [shape = 'u8[8192]{0}', space=vmem, size = 0x2000, scoped, tag = 'output window, operand 0, single buffered']
    %8 = vsyncpa [#allocation3], 0
    %9 = vsyncpa [#allocation6], 0
    %10 = vsyncpa [#allocation4], 0
    // Predicated region
    $region2: #{tpu_custom_call.1} parent=1 // pred_check
      _
    $region3: #{tpu_custom_call.1} parent=1 // pred_check_branch
      %12 = sbr.rel (0) target = $region5
    $region4: #{tpu_custom_call.1} parent=1 // pred_region
      %s14 = ssub.s32 512, 512
      %15 = vsyncadd [#allocation3], %s14
      %s16 = sshll.u32 [#allocation2], 4
      %s17 = int_to_ptr.vmem [resolvable:$true] %s16
      %22 = dma.hbm_to_vmem [thread:$0]  %s0, 512, %s17, [#allocation3], 256, 256, 16
    $region5: #{tpu_custom_call.1} parent=1 // pred_fallthru
      _
    // Predicated region
    $region6: #{tpu_custom_call.1} parent=1 // pred_check
      _
    $region7: #{tpu_custom_call.1} parent=1 // pred_check_branch
      %24 = sbr.rel (0) target = $region9
    $region8: #{tpu_custom_call.1} parent=1 // pred_region
      %s26 = ssub.s32 4096, 4096
      %27 = vsyncadd [#allocation6], %s26
      %s28 = sshll.u32 [#allocation5], 4
      %s29 = int_to_ptr.vmem [resolvable:$true] %s28
      %34 = dma.hbm_to_vmem [thread:$0]  %s1, 4096, %s29, [#allocation6], 128, 128, 8
    $region9: #{tpu_custom_call.1} parent=1 // pred_fallthru
      _
    // Predicated region
    $region10: #{tpu_custom_call.1} parent=1 // pred_check
      _
    $region11: #{tpu_custom_call.1} parent=1 // pred_check_branch
      %36 = sbr.rel (0) target = $region13
    $region12: #{tpu_custom_call.1} parent=1 // pred_region
      _
    $region13: #{tpu_custom_call.1} parent=1 // pred_fallthru
      _
    // Predicated region
    $region14: #{tpu_custom_call.1} parent=1 // pred_check
      _
    $region15: #{tpu_custom_call.1} parent=1 // pred_check_branch
      %38 = sbr.rel (0) target = $region17
    $region16: #{tpu_custom_call.1} parent=1 // pred_region
      %39 = dma.done [#allocation3], 512
    $region17: #{tpu_custom_call.1} parent=1 // pred_fallthru
      _
    // Predicated region
    $region18: #{tpu_custom_call.1} parent=1 // pred_check
      _
    $region19: #{tpu_custom_call.1} parent=1 // pred_check_branch
      %41 = sbr.rel (0) target = $region21
    $region20: #{tpu_custom_call.1} parent=1 // pred_region
      %42 = dma.done [#allocation6], 4096
    $region21: #{tpu_custom_call.1} parent=1 // pred_fallthru
      _
    %v43 = vld [vmem:[#allocation2] sm:$0xff]
    %v44 = vld [vmem:[#allocation2 + $0x8] sm:$0xff]
    %v45 = vld [vmem:[#allocation2 + $0x10] sm:$0xff]
    %v46 = vld [vmem:[#allocation2 + $0x18] sm:$0xff]
    %v47 = vpack.c.bf16 %v45, %v43
    %v48 = vpack.c.bf16 %v46, %v44
    %v49 = vld [vmem:[#allocation5] sm:$0xff]
    %v50 = vld [vmem:[#allocation5 + $0x8] sm:$0xff]
    %v51 = vld [vmem:[#allocation5 + $0x10] sm:$0xff]
    %v52 = vld [vmem:[#allocation5 + $0x18] sm:$0xff]
    %v53 = vld [vmem:[#allocation5 + $0x20] sm:$0xff]
    %v54 = vld [vmem:[#allocation5 + $0x28] sm:$0xff]
    %v55 = vld [vmem:[#allocation5 + $0x30] sm:$0xff]
    %v56 = vld [vmem:[#allocation5 + $0x38] sm:$0xff]
    %v57 = vld [vmem:[#allocation5 + $0x40] sm:$0xff]
    %v58 = vld [vmem:[#allocation5 + $0x48] sm:$0xff]
    %v59 = vld [vmem:[#allocation5 + $0x50] sm:$0xff]
    %v60 = vld [vmem:[#allocation5 + $0x58] sm:$0xff]
    %v61 = vld [vmem:[#allocation5 + $0x60] sm:$0xff]
    %v62 = vld [vmem:[#allocation5 + $0x68] sm:$0xff]
    %v63 = vld [vmem:[#allocation5 + $0x70] sm:$0xff]
    %v64 = vld [vmem:[#allocation5 + $0x78] sm:$0xff]
    %v65 = vld [vmem:[#allocation5 + $0x80] sm:$0xff]
    %v66 = vld [vmem:[#allocation5 + $0x88] sm:$0xff]
    %v67 = vld [vmem:[#allocation5 + $0x90] sm:$0xff]
    %v68 = vld [vmem:[#allocation5 + $0x98] sm:$0xff]
    %v69 = vld [vmem:[#allocation5 + $0xa0] sm:$0xff]
    %v70 = vld [vmem:[#allocation5 + $0xa8] sm:$0xff]
    %v71 = vld [vmem:[#allocation5 + $0xb0] sm:$0xff]
    %v72 = vld [vmem:[#allocation5 + $0xb8] sm:$0xff]
    %v73 = vld [vmem:[#allocation5 + $0xc0] sm:$0xff]
    %v74 = vld [vmem:[#allocation5 + $0xc8] sm:$0xff]
    %v75 = vld [vmem:[#allocation5 + $0xd0] sm:$0xff]
    %v76 = vld [vmem:[#allocation5 + $0xd8] sm:$0xff]
    %v77 = vld [vmem:[#allocation5 + $0xe0] sm:$0xff]
    %v78 = vld [vmem:[#allocation5 + $0xe8] sm:$0xff]
    %v79 = vld [vmem:[#allocation5 + $0xf0] sm:$0xff]
    %v80 = vld [vmem:[#allocation5 + $0xf8] sm:$0xff]
    %v81 = vld [vmem:[%s2] sm:$0x3]
    %v83 = vlaneseq
    %v84 = vshrl.u32 %v83, 7
    %v85 = vsub.s32 0, %v84
    %v86 = vrot.slane %v81, %v85
    %v87 = vlaneseq
    %v88 = vshrl.u32 %v87, 7
    %v89 = vsub.s32 1, %v88
    %v90 = vrot.slane %v81, %v89
    %v125 = vunpack.c.l.b16 %v49
    %v126 = vunpack.c.h.b16 %v49
    %v127 = vunpack.c.l.b16 %v50
    %v128 = vunpack.c.h.b16 %v50
    %v129 = vunpack.c.l.b16 %v51
    %v130 = vunpack.c.h.b16 %v51
    %v131 = vunpack.c.l.b16 %v52
    %v132 = vunpack.c.h.b16 %v52
    %v133 = vunpack.c.l.b16 %v53
    %v134 = vunpack.c.h.b16 %v53
    %v135 = vunpack.c.l.b16 %v54
    %v136 = vunpack.c.h.b16 %v54
    %v137 = vunpack.c.l.b16 %v55
    %v138 = vunpack.c.h.b16 %v55
    %v139 = vunpack.c.l.b16 %v56
    %v140 = vunpack.c.h.b16 %v56
    %v141 = vunpack.c.l.b16 %v57
    %v142 = vunpack.c.h.b16 %v57
    %v143 = vunpack.c.l.b16 %v58
    %v144 = vunpack.c.h.b16 %v58
    %v145 = vunpack.c.l.b16 %v59
    %v146 = vunpack.c.h.b16 %v59
    %v147 = vunpack.c.l.b16 %v60
    %v148 = vunpack.c.h.b16 %v60
    %v149 = vunpack.c.l.b16 %v61
    %v150 = vunpack.c.h.b16 %v61
    %v151 = vunpack.c.l.b16 %v62
    %v152 = vunpack.c.h.b16 %v62
    %v153 = vunpack.c.l.b16 %v63
    %v154 = vunpack.c.h.b16 %v63
    %v155 = vunpack.c.l.b16 %v64
    %v156 = vunpack.c.h.b16 %v64
    %v157 = vunpack.c.l.b16 %v65
    %v158 = vunpack.c.h.b16 %v65
    %v159 = vunpack.c.l.b16 %v66
    %v160 = vunpack.c.h.b16 %v66
    %v161 = vunpack.c.l.b16 %v67
    %v162 = vunpack.c.h.b16 %v67
    %v163 = vunpack.c.l.b16 %v68
    %v164 = vunpack.c.h.b16 %v68
    %v165 = vunpack.c.l.b16 %v69
    %v166 = vunpack.c.h.b16 %v69
    %v167 = vunpack.c.l.b16 %v70
    %v168 = vunpack.c.h.b16 %v70
    %v169 = vunpack.c.l.b16 %v71
    %v170 = vunpack.c.h.b16 %v71
    %v171 = vunpack.c.l.b16 %v72
    %v172 = vunpack.c.h.b16 %v72
    %v173 = vunpack.c.l.b16 %v73
    %v174 = vunpack.c.h.b16 %v73
    %v175 = vunpack.c.l.b16 %v74
    %v176 = vunpack.c.h.b16 %v74
    %v177 = vunpack.c.l.b16 %v75
    %v178 = vunpack.c.h.b16 %v75
    %v179 = vunpack.c.l.b16 %v76
    %v180 = vunpack.c.h.b16 %v76
    %v181 = vunpack.c.l.b16 %v77
    %v182 = vunpack.c.h.b16 %v77
    %v183 = vunpack.c.l.b16 %v78
    %v184 = vunpack.c.h.b16 %v78
    %v185 = vunpack.c.l.b16 %v79
    %v186 = vunpack.c.h.b16 %v79
    %v187 = vunpack.c.l.b16 %v80
    %v188 = vunpack.c.h.b16 %v80
    %v189 = vpack.c.b16 %v127, %v125
    %v190 = vpack.c.b16 %v128, %v126
    %v191 = vpack.c.b16 %v131, %v129
    %v192 = vpack.c.b16 %v132, %v130
    %v193 = vpack.c.b16 %v135, %v133
    %v194 = vpack.c.b16 %v136, %v134
    %v195 = vpack.c.b16 %v139, %v137
    %v196 = vpack.c.b16 %v140, %v138
    %v197 = vpack.c.b16 %v143, %v141
    %v198 = vpack.c.b16 %v144, %v142
    %v199 = vpack.c.b16 %v147, %v145
    %v200 = vpack.c.b16 %v148, %v146
    %v201 = vpack.c.b16 %v151, %v149
    %v202 = vpack.c.b16 %v152, %v150
    %v203 = vpack.c.b16 %v155, %v153
    %v204 = vpack.c.b16 %v156, %v154
    %v205 = vpack.c.b16 %v159, %v157
    %v206 = vpack.c.b16 %v160, %v158
    %v207 = vpack.c.b16 %v163, %v161
    %v208 = vpack.c.b16 %v164, %v162
    %v209 = vpack.c.b16 %v167, %v165
    %v210 = vpack.c.b16 %v168, %v166
    %v211 = vpack.c.b16 %v171, %v169
    %v212 = vpack.c.b16 %v172, %v170
    %v213 = vpack.c.b16 %v175, %v173
    %v214 = vpack.c.b16 %v176, %v174
    %v215 = vpack.c.b16 %v179, %v177
    %v216 = vpack.c.b16 %v180, %v178
    %v217 = vpack.c.b16 %v183, %v181
    %v218 = vpack.c.b16 %v184, %v182
    %v219 = vpack.c.b16 %v187, %v185
    %v220 = vpack.c.b16 %v188, %v186
    %253 = vmatprep.subr.bf16.mxu0 %v204
    %254 = vmatpush1.bf16.msra.mxu0 %v203
    %255 = vmatprep.subr.bf16.mxu0 %v202
    %256 = vmatpush1.bf16.msra.mxu0 %v201
    %257 = vmatprep.subr.bf16.mxu0 %v200
    %258 = vmatpush1.bf16.msra.mxu0 %v199
    %259 = vmatprep.subr.bf16.mxu0 %v198
    %260 = vmatpush1.bf16.msra.mxu0 %v197
    %261 = vmatprep.subr.bf16.mxu0 %v196
    %262 = vmatpush1.bf16.msra.mxu0 %v195
    %263 = vmatprep.subr.bf16.mxu0 %v194
    %264 = vmatpush1.bf16.msra.mxu0 %v193
    %265 = vmatprep.subr.bf16.mxu0 %v192
    %266 = vmatpush1.bf16.msra.mxu0 %v191
    %267 = vmatprep.subr.bf16.mxu0 %v190
    %268 = vmatpush1.bf16.msra.mxu0 %v189
    %269 = vmatprep.subr.bf16.mxu0 %v220
    %270 = vmatpush2.bf16.msra.mxu0 %v219
    %271 = vmatprep.subr.bf16.mxu0 %v218
    %272 = vmatpush2.bf16.msra.mxu0 %v217
    %273 = vmatprep.subr.bf16.mxu0 %v216
    %274 = vmatpush2.bf16.msra.mxu0 %v215
    %275 = vmatprep.subr.bf16.mxu0 %v214
    %276 = vmatpush2.bf16.msra.mxu0 %v213
    %277 = vmatprep.subr.bf16.mxu0 %v212
    %278 = vmatpush2.bf16.msra.mxu0 %v211
    %279 = vmatprep.subr.bf16.mxu0 %v210
    %280 = vmatpush2.bf16.msra.mxu0 %v209
    %281 = vmatprep.subr.bf16.mxu0 %v208
    %282 = vmatpush2.bf16.msra.mxu0 %v207
    %283 = vmatprep.subr.bf16.mxu0 %v206
    %284 = vmatpush2.bf16.msra.mxu0 %v205
    %285 = vmatprep.mubr.bf16.mxu0 %v48
    %286 = vmatmul.mubr.bf16.gmra.mxu0 %v47
    %v287 = vpop.f32.mrf.mxu0
    %v288 = vadd.f32 %v86, %v287
    %v289 = vpop.f32.mrf.mxu0
    %v290 = vadd.f32 %v90, %v289
    %v291 = vpop.f32.mrf.mxu0
    %v292 = vadd.f32 %v86, %v291
    %v293 = vpop.f32.mrf.mxu0
    %v294 = vadd.f32 %v90, %v293
    %295 = vdwg.mxu0
    %v296 = vpack.c.bf16 %v292, %v288
    %v297 = vpack.c.bf16 %v294, %v290
    %v300 = vunpack.c.l.b16 %v296
    %v301 = vunpack.c.l.b16 %v297
    %v302 = vunpack.c.h.b16 %v296
    %v303 = vunpack.c.h.b16 %v297
    %v304 = vpack.c.b16 %v301, %v300
    %v305 = vpack.c.b16 %v303, %v302
    %308 = vst [vmem:[#allocation7] sm:$0xff] %v304
    %309 = vst [vmem:[#allocation7 + $0x8] sm:$0xff] %v305
    // Predicated region
    $region22: #{tpu_custom_call.1} parent=1 // pred_check
      _
    $region23: #{tpu_custom_call.1} parent=1 // pred_check_branch
      %311 = sbr.rel (0) target = $region25
    $region24: #{tpu_custom_call.1} parent=1 // pred_region
      %s313 = ssub.s32 256, 256
      %314 = vsyncadd [#allocation4], %s313
      %s315 = sshll.u32 [#allocation7], 4
      %s316 = int_to_ptr.vmem [resolvable:$true] %s315
      %321 = dma.vmem_to_hbm [thread:$0]  %s316, 256, %s3, [#allocation4], 128, 128, 8
    $region25: #{tpu_custom_call.1} parent=1 // pred_fallthru
      _
    // Predicated region
    $region26: #{tpu_custom_call.1} parent=1 // pred_check
      _
    $region27: #{tpu_custom_call.1} parent=1 // pred_check_branch
      %323 = sbr.rel (0) target = $region29
    $region28: #{tpu_custom_call.1} parent=1 // pred_region
      %324 = dma.done [#allocation4], 256
    $region29: #{tpu_custom_call.1} parent=1 // pred_fallthru
      _
    %325 = vsyncpa [#allocation3], 1
    %326 = vsyncpa [#allocation6], 1
    %327 = vsyncpa [#allocation4], 1

</llo_original>
